<compile_context>
chip_gen: v7x
topology: tpu7x:2x2x1
jax: 0.10.0
libtpu: 0.0.40
codegen_flags: <defaults>
</compile_context>

<pallas_src>
import jax
import jax.numpy as jnp
from jax import lax
from jax.experimental import pallas as pl
from jax.experimental.pallas import tpu as pltpu

EPS = 1e-5
OUT_DIM = 100          # logical head width
HEAD_PAD = 256         # lane-dense packed head width (mu @ 0, log_var @ 128)
LV_OFF = 128           # column offset of the log_var head inside fused weight
K_IN = 8               # input features padded 5 -> 8


def encoder_kernel(
    x_ref,        # (B, 8)      f32  input, feature-padded 5 -> 8
    w0_ref,       # (8, 128)    f32  Linear(5,64) weight, padded to full lanes
    w1_ref,       # (128, 128)  f32  Linear(64,128) weight, zero rows 64:128
    w2t_ref,      # (1, 128)    f32  Linear(128,1) weight, transposed
    w3_ref,       # (1, 1024)   f32  Linear(1,1024) weight
    b3_ref,       # (1, 1024)   f32  Linear(1,1024) bias
    wh_hbm_ref,   # (1024, 256) bf16 fused head weight (left in HBM, manual DMA)
    bh_ref,       # (1, 256)    f32  fused head bias
    small_ref,    # (8, 128)    f32  packed: g0, be0, g1, be1, b2, b0, b1
    out_ref,      # (B, 256)    f32  sigmoid(fused head)
    wh_vmem,      # (1024, 256) bf16 VMEM landing buffer for the head weight
    wh_sem,       # ()          DMA semaphore
):
    # Start the dominant head-weight transfer immediately; it overlaps with
    # everything up to the head matmul.
    wh_copy = pltpu.make_async_copy(wh_hbm_ref, wh_vmem, wh_sem)
    wh_copy.start()

    x = x_ref[...]                                                       # (B, 8)

    g0 = small_ref[0:1, :]
    be0 = small_ref[1:2, :]
    g1 = small_ref[2:3, :]
    be1 = small_ref[3:4, :]
    b2 = small_ref[4:5, 0:1]
    b0 = small_ref[5:6, :]
    b1 = small_ref[6:7, :]

    # ---- fc0 block: Linear(5,64) -> BN(64) -> ReLU (full 128-lane padded) ----
    # K=8 unrolled VPU multiply-accumulate; avoids an MXU round-trip on the
    # serial dependency chain.
    h = x[:, 0:1] * w0_ref[0:1, :] + b0                                  # (B, 128)
    for k in range(1, K_IN):
        h = h + x[:, k:k + 1] * w0_ref[k:k + 1, :]
    mean = jnp.mean(h, axis=0, keepdims=True)
    d = h - mean
    var = jnp.mean(d * d, axis=0, keepdims=True)
    h = jnp.maximum(d * lax.rsqrt(var + EPS) * g0 + be0, 0.0)

    # ---- Linear(64,128) -> BN(128) -> ReLU (padded w1 rows are zero) ----
    h = jnp.dot(h, w1_ref[...], preferred_element_type=jnp.float32) + b1  # (B,128)
    mean = jnp.mean(h, axis=0, keepdims=True)
    d = h - mean
    var = jnp.mean(d * d, axis=0, keepdims=True)
    h = jnp.maximum(d * lax.rsqrt(var + EPS) * g1 + be1, 0.0)

    # ---- Linear(128,1) -> ReLU: VPU multiply + lane reduce (skip MXU) ----
    h = jnp.sum(h * w2t_ref[...], axis=-1, keepdims=True) + b2            # (B, 1)
    h = jnp.maximum(h, 0.0)

    # ---- fc1: Linear(1,1024) -> ReLU == broadcast outer product ----
    h = jnp.maximum(h * w3_ref[...] + b3_ref[...], 0.0)                   # (B,1024)

    # ---- fused heads: wait on weight DMA, one bf16 MXU pass, one sigmoid ----
    wh_copy.wait()
    z = jnp.dot(h.astype(jnp.bfloat16), wh_vmem[...],
                preferred_element_type=jnp.float32) + bh_ref[...]         # (B, 256)
    out_ref[...] = jax.nn.sigmoid(z)


def pack_params(p):
    """Wrapper-side layout prep (pad / fuse / cast). Pure XLA, done once."""
    # fc0 weight padded to full lanes; extra rows/cols are zero.
    w0 = jnp.zeros((K_IN, 128), jnp.float32).at[0:5, 0:64].set(p["w0"])
    # Linear(64,128) weight with zero rows for the padded fc0 columns.
    w1 = jnp.zeros((128, 128), jnp.float32).at[0:64, :].set(p["w1"])
    w2t = p["w2"].T                                                       # (1, 128)

    # Fused head weight/bias: mu at cols [0:100], log_var at cols [128:228].
    # TODO(synk): quantize wh to int8 (v5e/v6e) / fp8 (v7x) with a per-column
    # scale if the DMA ever becomes exposed again at larger configurations.
    wh = jnp.zeros((1024, HEAD_PAD), jnp.float32)
    wh = wh.at[:, 0:OUT_DIM].set(p["w21"])
    wh = wh.at[:, LV_OFF:LV_OFF + OUT_DIM].set(p["w22"])
    wh = wh.astype(jnp.bfloat16)
    bh = jnp.zeros((1, HEAD_PAD), jnp.float32)
    bh = bh.at[:, 0:OUT_DIM].set(p["b21"])
    bh = bh.at[:, LV_OFF:LV_OFF + OUT_DIM].set(p["b22"])

    # Packed small vectors: one (8, 128) tile instead of 7 tiny inputs.
    small = jnp.zeros((8, 128), jnp.float32)
    small = small.at[0, 0:64].set(p["g0"].reshape(64))
    small = small.at[0, 64:128].set(1.0)                 # padded gamma (unused)
    small = small.at[1, 0:64].set(p["be0"].reshape(64))  # padded beta stays 0
    small = small.at[2, :].set(p["g1"].reshape(128))
    small = small.at[3, :].set(p["be1"].reshape(128))
    small = small.at[4, 0].set(p["b2"].reshape(()))
    small = small.at[5, 0:64].set(p["b0"].reshape(64))   # padded b0 stays 0
    small = small.at[6, :].set(p["b1"].reshape(128))

    return {
        "w0": w0, "w1": w1, "w2t": w2t,
        "w3": p["w3"], "b3": p["b3"],
        "wh": wh, "bh": bh, "small": small,
    }


def encoder_forward(x, packed):
    """x: (B, 5) float32.  Returns (mu, log_var), each (B, 1, 100)."""
    B = x.shape[0]
    x_pad = jnp.pad(x, ((0, 0), (0, K_IN - x.shape[1])))                  # (B, 8)

    inputs = (
        x_pad,
        packed["w0"], packed["w1"], packed["w2t"],
        packed["w3"], packed["b3"],
        packed["wh"], packed["bh"], packed["small"],
    )
    vmem_spec = pl.BlockSpec(memory_space=pltpu.MemorySpace.VMEM)
    hbm_spec = pl.BlockSpec(memory_space=pl.ANY)   # wh: manual DMA inside kernel

    out = pl.pallas_call(
        encoder_kernel,
        out_shape=jax.ShapeDtypeStruct((B, HEAD_PAD), jnp.float32),
        in_specs=[vmem_spec] * 6 + [hbm_spec] + [vmem_spec] * 2,
        out_specs=vmem_spec,
        scratch_shapes=[
            pltpu.VMEM((1024, HEAD_PAD), jnp.bfloat16),   # wh landing buffer
            pltpu.SemaphoreType.DMA(()),
        ],
    )(*inputs)

    mu = out[:, 0:OUT_DIM].reshape(B, 1, OUT_DIM)
    log_var = out[:, LV_OFF:LV_OFF + OUT_DIM].reshape(B, 1, OUT_DIM)
    return mu, log_var
    # TODO(synk): batch-tiled two-pass-BN variant (grid over B, weights
    # resident, 'parallel' second pass) before running at very large batch,
    # especially on v7x's 64 MiB VMEM / 2 TensorCores.


def init_params(key):
    """Deterministic synthetic parameters (PyTorch-style uniform fan-in init)."""
    def linear(key, fin, fout):
        kw, kb = jax.random.split(key)
        bound = 1.0 / jnp.sqrt(fin)
        w = jax.random.uniform(kw, (fin, fout), jnp.float32, -bound, bound)
        b = jax.random.uniform(kb, (1, fout), jnp.float32, -bound, bound)
        return w, b

    keys = jax.random.split(key, 8)
    p = {}
    p["w0"], p["b0"] = linear(keys[0], 5, 64)
    p["g0"] = jnp.ones((1, 64), jnp.float32)
    p["be0"] = jnp.zeros((1, 64), jnp.float32)
    p["w1"], p["b1"] = linear(keys[1], 64, 128)
    p["g1"] = jnp.ones((1, 128), jnp.float32)
    p["be1"] = jnp.zeros((1, 128), jnp.float32)
    p["w2"], p["b2"] = linear(keys[2], 128, 1)
    p["w3"], p["b3"] = linear(keys[3], 1, 1024)
    p["w21"], p["b21"] = linear(keys[4], 1024, 100)
    p["w22"], p["b22"] = linear(keys[5], 1024, 100)
    return p


def encoder_reference(x, p):
    """Pure-JAX f32 reference matching the PyTorch module (train-mode BN)."""
    def bn(h, g, b):
        m = jnp.mean(h, axis=0, keepdims=True)
        v = jnp.mean((h - m) ** 2, axis=0, keepdims=True)
        return (h - m) / jnp.sqrt(v + EPS) * g + b

    h = x @ p["w0"] + p["b0"]
    h = jnp.maximum(bn(h, p["g0"], p["be0"]), 0.0)
    h = h @ p["w1"] + p["b1"]
    h = jnp.maximum(bn(h, p["g1"], p["be1"]), 0.0)
    h = jnp.maximum(h @ p["w2"] + p["b2"], 0.0)
    h = jnp.maximum(h @ p["w3"] + p["b3"], 0.0)
    mu = jax.nn.sigmoid(h @ p["w21"] + p["b21"])
    lv = jax.nn.sigmoid(h @ p["w22"] + p["b22"])
    B = x.shape[0]
    return mu.reshape(B, 1, -1), lv.reshape(B, 1, -1)


if __name__ == "__main__":
    key = jax.random.PRNGKey(0)
    kx, kp = jax.random.split(key)

    B = 8  # batch (multiple of 8 sublanes); module input feature dim is 5
    x = jax.random.normal(kx, (B, 5), dtype=jnp.float32)
    params = init_params(kp)
    packed = pack_params(params)

    mu, log_var = encoder_forward(x, packed)
    jax.block_until_ready((mu, log_var))

    mu_ref, lv_ref = encoder_reference(x, params)
    assert mu.shape == (B, 1, OUT_DIM) and log_var.shape == (B, 1, OUT_DIM)
    # bf16 head weights (f32 accumulation) -> looser tolerance post-sigmoid.
    assert jnp.allclose(mu, mu_ref, atol=2e-2, rtol=2e-2)
    assert jnp.allclose(log_var, lv_ref, atol=2e-2, rtol=2e-2)

    print("KERNEL_OK")
</pallas_src>

<mosaic_0001>
module attributes {stable_mosaic.version = 11 : i64} {
  func.func @encoder_kernel(%arg0: memref<8x8xf32, #tpu.memory_space<vmem>>, %arg1: memref<8x128xf32, #tpu.memory_space<vmem>>, %arg2: memref<128x128xf32, #tpu.memory_space<vmem>>, %arg3: memref<1x128xf32, #tpu.memory_space<vmem>>, %arg4: memref<1x1024xf32, #tpu.memory_space<vmem>>, %arg5: memref<1x1024xf32, #tpu.memory_space<vmem>>, %arg6: memref<1024x256xbf16, #tpu.memory_space<any>>, %arg7: memref<1x256xf32, #tpu.memory_space<vmem>>, %arg8: memref<8x128xf32, #tpu.memory_space<vmem>>, %arg9: memref<8x256xf32, #tpu.memory_space<vmem>>, %arg10: memref<1024x256xbf16, #tpu.memory_space<vmem>>, %arg11: memref<!tpu.dma_semaphore, #tpu.memory_space<semaphore_mem>>) attributes {dimension_semantics = [], scalar_prefetch = 0 : i64, scratch_operands = 2 : i64, tpu.core_type = #tpu.core_type<tc>} {
    tpu.enqueue_dma source(%arg6 : memref<1024x256xbf16, #tpu.memory_space<any>>) target(%arg10 : memref<1024x256xbf16, #tpu.memory_space<vmem>>) target_semaphore(%arg11 : memref<!tpu.dma_semaphore, #tpu.memory_space<semaphore_mem>>)
    %c0 = arith.constant 0 : index
    %c0_0 = arith.constant 0 : index
    %0 = vector.load %arg0[%c0, %c0_0] : memref<8x8xf32, #tpu.memory_space<vmem>>, vector<8x8xf32>
    %c0_1 = arith.constant 0 : index
    %c0_2 = arith.constant 0 : index
    %1 = vector.load %arg8[%c0_1, %c0_2] : memref<8x128xf32, #tpu.memory_space<vmem>>, vector<1x128xf32>
    %c1 = arith.constant 1 : index
    %c0_3 = arith.constant 0 : index
    %2 = vector.load %arg8[%c1, %c0_3] : memref<8x128xf32, #tpu.memory_space<vmem>>, vector<1x128xf32>
    %c2 = arith.constant 2 : index
    %c0_4 = arith.constant 0 : index
    %3 = vector.load %arg8[%c2, %c0_4] : memref<8x128xf32, #tpu.memory_space<vmem>>, vector<1x128xf32>
    %c3 = arith.constant 3 : index
    %c0_5 = arith.constant 0 : index
    %4 = vector.load %arg8[%c3, %c0_5] : memref<8x128xf32, #tpu.memory_space<vmem>>, vector<1x128xf32>
    %c4 = arith.constant 4 : index
    %c0_6 = arith.constant 0 : index
    %5 = vector.load %arg8[%c4, %c0_6] : memref<8x128xf32, #tpu.memory_space<vmem>>, vector<1x1xf32>
    %c5 = arith.constant 5 : index
    %c0_7 = arith.constant 0 : index
    %6 = vector.load %arg8[%c5, %c0_7] : memref<8x128xf32, #tpu.memory_space<vmem>>, vector<1x128xf32>
    %c6 = arith.constant 6 : index
    %c0_8 = arith.constant 0 : index
    %7 = vector.load %arg8[%c6, %c0_8] : memref<8x128xf32, #tpu.memory_space<vmem>>, vector<1x128xf32>
    %8 = vector.extract_strided_slice %0 {offsets = [0, 0], sizes = [8, 1], strides = [1, 1]} : vector<8x8xf32> to vector<8x1xf32>
    %c0_9 = arith.constant 0 : index
    %c0_10 = arith.constant 0 : index
    %9 = vector.load %arg1[%c0_9, %c0_10] : memref<8x128xf32, #tpu.memory_space<vmem>>, vector<1x128xf32>
    %10 = vector.broadcast %8 : vector<8x1xf32> to vector<8x128xf32>
    %11 = vector.broadcast %9 : vector<1x128xf32> to vector<8x128xf32>
    %12 = arith.mulf %10, %11 : vector<8x128xf32>
    %13 = vector.broadcast %6 : vector<1x128xf32> to vector<8x128xf32>
    %14 = arith.addf %12, %13 : vector<8x128xf32>
    %15 = vector.extract_strided_slice %0 {offsets = [0, 1], sizes = [8, 1], strides = [1, 1]} : vector<8x8xf32> to vector<8x1xf32>
    %c1_11 = arith.constant 1 : index
    %c0_12 = arith.constant 0 : index
    %16 = vector.load %arg1[%c1_11, %c0_12] : memref<8x128xf32, #tpu.memory_space<vmem>>, vector<1x128xf32>
    %17 = vector.broadcast %15 : vector<8x1xf32> to vector<8x128xf32>
    %18 = vector.broadcast %16 : vector<1x128xf32> to vector<8x128xf32>
    %19 = arith.mulf %17, %18 : vector<8x128xf32>
    %20 = arith.addf %14, %19 : vector<8x128xf32>
    %21 = vector.extract_strided_slice %0 {offsets = [0, 2], sizes = [8, 1], strides = [1, 1]} : vector<8x8xf32> to vector<8x1xf32>
    %c2_13 = arith.constant 2 : index
    %c0_14 = arith.constant 0 : index
    %22 = vector.load %arg1[%c2_13, %c0_14] : memref<8x128xf32, #tpu.memory_space<vmem>>, vector<1x128xf32>
    %23 = vector.broadcast %21 : vector<8x1xf32> to vector<8x128xf32>
    %24 = vector.broadcast %22 : vector<1x128xf32> to vector<8x128xf32>
    %25 = arith.mulf %23, %24 : vector<8x128xf32>
    %26 = arith.addf %20, %25 : vector<8x128xf32>
    %27 = vector.extract_strided_slice %0 {offsets = [0, 3], sizes = [8, 1], strides = [1, 1]} : vector<8x8xf32> to vector<8x1xf32>
    %c3_15 = arith.constant 3 : index
    %c0_16 = arith.constant 0 : index
    %28 = vector.load %arg1[%c3_15, %c0_16] : memref<8x128xf32, #tpu.memory_space<vmem>>, vector<1x128xf32>
    %29 = vector.broadcast %27 : vector<8x1xf32> to vector<8x128xf32>
    %30 = vector.broadcast %28 : vector<1x128xf32> to vector<8x128xf32>
    %31 = arith.mulf %29, %30 : vector<8x128xf32>
    %32 = arith.addf %26, %31 : vector<8x128xf32>
    %33 = vector.extract_strided_slice %0 {offsets = [0, 4], sizes = [8, 1], strides = [1, 1]} : vector<8x8xf32> to vector<8x1xf32>
    %c4_17 = arith.constant 4 : index
    %c0_18 = arith.constant 0 : index
    %34 = vector.load %arg1[%c4_17, %c0_18] : memref<8x128xf32, #tpu.memory_space<vmem>>, vector<1x128xf32>
    %35 = vector.broadcast %33 : vector<8x1xf32> to vector<8x128xf32>
    %36 = vector.broadcast %34 : vector<1x128xf32> to vector<8x128xf32>
    %37 = arith.mulf %35, %36 : vector<8x128xf32>
    %38 = arith.addf %32, %37 : vector<8x128xf32>
    %39 = vector.extract_strided_slice %0 {offsets = [0, 5], sizes = [8, 1], strides = [1, 1]} : vector<8x8xf32> to vector<8x1xf32>
    %c5_19 = arith.constant 5 : index
    %c0_20 = arith.constant 0 : index
    %40 = vector.load %arg1[%c5_19, %c0_20] : memref<8x128xf32, #tpu.memory_space<vmem>>, vector<1x128xf32>
    %41 = vector.broadcast %39 : vector<8x1xf32> to vector<8x128xf32>
    %42 = vector.broadcast %40 : vector<1x128xf32> to vector<8x128xf32>
    %43 = arith.mulf %41, %42 : vector<8x128xf32>
    %44 = arith.addf %38, %43 : vector<8x128xf32>
    %45 = vector.extract_strided_slice %0 {offsets = [0, 6], sizes = [8, 1], strides = [1, 1]} : vector<8x8xf32> to vector<8x1xf32>
    %c6_21 = arith.constant 6 : index
    %c0_22 = arith.constant 0 : index
    %46 = vector.load %arg1[%c6_21, %c0_22] : memref<8x128xf32, #tpu.memory_space<vmem>>, vector<1x128xf32>
    %47 = vector.broadcast %45 : vector<8x1xf32> to vector<8x128xf32>
    %48 = vector.broadcast %46 : vector<1x128xf32> to vector<8x128xf32>
    %49 = arith.mulf %47, %48 : vector<8x128xf32>
    %50 = arith.addf %44, %49 : vector<8x128xf32>
    %51 = vector.extract_strided_slice %0 {offsets = [0, 7], sizes = [8, 1], strides = [1, 1]} : vector<8x8xf32> to vector<8x1xf32>
    %c7 = arith.constant 7 : index
    %c0_23 = arith.constant 0 : index
    %52 = vector.load %arg1[%c7, %c0_23] : memref<8x128xf32, #tpu.memory_space<vmem>>, vector<1x128xf32>
    %53 = vector.broadcast %51 : vector<8x1xf32> to vector<8x128xf32>
    %54 = vector.broadcast %52 : vector<1x128xf32> to vector<8x128xf32>
    %55 = arith.mulf %53, %54 : vector<8x128xf32>
    %56 = arith.addf %50, %55 : vector<8x128xf32>
    %cst = arith.constant dense<0.000000e+00> : vector<128xf32>
    %57 = vector.multi_reduction <add>, %56, %cst [0] : vector<8x128xf32> to vector<128xf32>
    %58 = vector.shape_cast %57 : vector<128xf32> to vector<1x128xf32>
    %cst_24 = arith.constant 8.000000e+00 : f32
    %59 = vector.broadcast %cst_24 : f32 to vector<1x128xf32>
    %60 = arith.divf %58, %59 : vector<1x128xf32>
    %61 = vector.broadcast %60 : vector<1x128xf32> to vector<8x128xf32>
    %62 = arith.subf %56, %61 : vector<8x128xf32>
    %63 = arith.mulf %62, %62 : vector<8x128xf32>
    %cst_25 = arith.constant dense<0.000000e+00> : vector<128xf32>
    %64 = vector.multi_reduction <add>, %63, %cst_25 [0] : vector<8x128xf32> to vector<128xf32>
    %65 = vector.shape_cast %64 : vector<128xf32> to vector<1x128xf32>
    %cst_26 = arith.constant 8.000000e+00 : f32
    %66 = vector.broadcast %cst_26 : f32 to vector<1x128xf32>
    %67 = arith.divf %65, %66 : vector<1x128xf32>
    %cst_27 = arith.constant 9.99999974E-6 : f32
    %68 = vector.broadcast %cst_27 : f32 to vector<1x128xf32>
    %69 = arith.addf %67, %68 : vector<1x128xf32>
    %70 = math.rsqrt %69 : vector<1x128xf32>
    %71 = vector.broadcast %70 : vector<1x128xf32> to vector<8x128xf32>
    %72 = arith.mulf %62, %71 : vector<8x128xf32>
    %73 = vector.broadcast %1 : vector<1x128xf32> to vector<8x128xf32>
    %74 = arith.mulf %72, %73 : vector<8x128xf32>
    %75 = vector.broadcast %2 : vector<1x128xf32> to vector<8x128xf32>
    %76 = arith.addf %74, %75 : vector<8x128xf32>
    %cst_28 = arith.constant 0.000000e+00 : f32
    %77 = vector.broadcast %cst_28 : f32 to vector<8x128xf32>
    %78 = arith.maximumf %76, %77 : vector<8x128xf32>
    %c0_29 = arith.constant 0 : index
    %c0_30 = arith.constant 0 : index
    %79 = vector.load %arg2[%c0_29, %c0_30] : memref<128x128xf32, #tpu.memory_space<vmem>>, vector<128x128xf32>
    %cst_31 = arith.constant dense<0.000000e+00> : vector<8x128xf32>
    %80 = tpu.matmul %78, %79, %cst_31 {dimension_numbers = #tpu.dot_dimension_numbers<[1], [0], [0], [1], [0, 0, 1, 1], [], []>} : vector<8x128xf32>, vector<128x128xf32>, vector<8x128xf32> -> vector<8x128xf32>
    %81 = vector.broadcast %7 : vector<1x128xf32> to vector<8x128xf32>
    %82 = arith.addf %80, %81 : vector<8x128xf32>
    %cst_32 = arith.constant dense<0.000000e+00> : vector<128xf32>
    %83 = vector.multi_reduction <add>, %82, %cst_32 [0] : vector<8x128xf32> to vector<128xf32>
    %84 = vector.shape_cast %83 : vector<128xf32> to vector<1x128xf32>
    %cst_33 = arith.constant 8.000000e+00 : f32
    %85 = vector.broadcast %cst_33 : f32 to vector<1x128xf32>
    %86 = arith.divf %84, %85 : vector<1x128xf32>
    %87 = vector.broadcast %86 : vector<1x128xf32> to vector<8x128xf32>
    %88 = arith.subf %82, %87 : vector<8x128xf32>
    %89 = arith.mulf %88, %88 : vector<8x128xf32>
    %cst_34 = arith.constant dense<0.000000e+00> : vector<128xf32>
    %90 = vector.multi_reduction <add>, %89, %cst_34 [0] : vector<8x128xf32> to vector<128xf32>
    %91 = vector.shape_cast %90 : vector<128xf32> to vector<1x128xf32>
    %cst_35 = arith.constant 8.000000e+00 : f32
    %92 = vector.broadcast %cst_35 : f32 to vector<1x128xf32>
    %93 = arith.divf %91, %92 : vector<1x128xf32>
    %cst_36 = arith.constant 9.99999974E-6 : f32
    %94 = vector.broadcast %cst_36 : f32 to vector<1x128xf32>
    %95 = arith.addf %93, %94 : vector<1x128xf32>
    %96 = math.rsqrt %95 : vector<1x128xf32>
    %97 = vector.broadcast %96 : vector<1x128xf32> to vector<8x128xf32>
    %98 = arith.mulf %88, %97 : vector<8x128xf32>
    %99 = vector.broadcast %3 : vector<1x128xf32> to vector<8x128xf32>
    %100 = arith.mulf %98, %99 : vector<8x128xf32>
    %101 = vector.broadcast %4 : vector<1x128xf32> to vector<8x128xf32>
    %102 = arith.addf %100, %101 : vector<8x128xf32>
    %cst_37 = arith.constant 0.000000e+00 : f32
    %103 = vector.broadcast %cst_37 : f32 to vector<8x128xf32>
    %104 = arith.maximumf %102, %103 : vector<8x128xf32>
    %c0_38 = arith.constant 0 : index
    %c0_39 = arith.constant 0 : index
    %105 = vector.load %arg3[%c0_38, %c0_39] : memref<1x128xf32, #tpu.memory_space<vmem>>, vector<1x128xf32>
    %106 = vector.broadcast %105 : vector<1x128xf32> to vector<8x128xf32>
    %107 = arith.mulf %104, %106 : vector<8x128xf32>
    %cst_40 = arith.constant dense<0.000000e+00> : vector<8xf32>
    %108 = vector.multi_reduction <add>, %107, %cst_40 [1] : vector<8x128xf32> to vector<8xf32>
    %109 = vector.shape_cast %108 : vector<8xf32> to vector<8x1xf32>
    %110 = vector.broadcast %5 : vector<1x1xf32> to vector<8x1xf32>
    %111 = arith.addf %109, %110 : vector<8x1xf32>
    %cst_41 = arith.constant 0.000000e+00 : f32
    %112 = vector.broadcast %cst_41 : f32 to vector<8x1xf32>
    %113 = arith.maximumf %111, %112 : vector<8x1xf32>
    %c0_42 = arith.constant 0 : index
    %c0_43 = arith.constant 0 : index
    %114 = vector.load %arg4[%c0_42, %c0_43] : memref<1x1024xf32, #tpu.memory_space<vmem>>, vector<1x1024xf32>
    %115 = vector.broadcast %113 : vector<8x1xf32> to vector<8x1024xf32>
    %116 = vector.broadcast %114 : vector<1x1024xf32> to vector<8x1024xf32>
    %117 = arith.mulf %115, %116 : vector<8x1024xf32>
    %c0_44 = arith.constant 0 : index
    %c0_45 = arith.constant 0 : index
    %118 = vector.load %arg5[%c0_44, %c0_45] : memref<1x1024xf32, #tpu.memory_space<vmem>>, vector<1x1024xf32>
    %119 = vector.broadcast %118 : vector<1x1024xf32> to vector<8x1024xf32>
    %120 = arith.addf %117, %119 : vector<8x1024xf32>
    %cst_46 = arith.constant 0.000000e+00 : f32
    %121 = vector.broadcast %cst_46 : f32 to vector<8x1024xf32>
    %122 = arith.maximumf %120, %121 : vector<8x1024xf32>
    tpu.wait_dma2 semaphore(%arg11 : memref<!tpu.dma_semaphore, #tpu.memory_space<semaphore_mem>>) src(%arg6 : memref<1024x256xbf16, #tpu.memory_space<any>>) dst(%arg10 : memref<1024x256xbf16, #tpu.memory_space<vmem>>)
    %123 = arith.truncf %122 : vector<8x1024xf32> to vector<8x1024xbf16>
    %c0_47 = arith.constant 0 : index
    %c0_48 = arith.constant 0 : index
    %124 = vector.load %arg10[%c0_47, %c0_48] : memref<1024x256xbf16, #tpu.memory_space<vmem>>, vector<1024x256xbf16>
    %cst_49 = arith.constant dense<0.000000e+00> : vector<8x256xf32>
    %125 = tpu.matmul %123, %124, %cst_49 {dimension_numbers = #tpu.dot_dimension_numbers<[1], [0], [0], [1], [0, 0, 1, 1], [], []>} : vector<8x1024xbf16>, vector<1024x256xbf16>, vector<8x256xf32> -> vector<8x256xf32>
    %c0_50 = arith.constant 0 : index
    %c0_51 = arith.constant 0 : index
    %126 = vector.load %arg7[%c0_50, %c0_51] : memref<1x256xf32, #tpu.memory_space<vmem>>, vector<1x256xf32>
    %127 = vector.broadcast %126 : vector<1x256xf32> to vector<8x256xf32>
    %128 = arith.addf %125, %127 : vector<8x256xf32>
    %129 = arith.negf %128 : vector<8x256xf32>
    %130 = math.exp %129 : vector<8x256xf32>
    %cst_52 = arith.constant 1.000000e+00 : f32
    %131 = vector.broadcast %cst_52 : f32 to vector<8x256xf32>
    %132 = arith.addf %131, %130 : vector<8x256xf32>
    %133 = arith.divf %131, %132 : vector<8x256xf32>
    %c0_53 = arith.constant 0 : index
    %c0_54 = arith.constant 0 : index
    %134 = vector.load %arg9[%c0_53, %c0_54] : memref<8x256xf32, #tpu.memory_space<vmem>>, vector<8x256xf32>
    tpu.vector_store %arg9[%c0_53, %c0_54], %133 {strides = array<i32>} : memref<8x256xf32, #tpu.memory_space<vmem>>, vector<8x256xf32>,
    return
  }
}

</mosaic_0001>

<llo_original>
// kernel: tpu_custom_call.1
$region0: #{tpu_custom_call.1}
  #allocation0 [shape = 'u32[]', space=smem, size = 0x4, offset = 0x4, fixed_abs, tag = 'smem constant byte address 0x4 - core index']
  #allocation1 [shape = 'u32[144,128]{1,0:T(1,128)}', space=vmem, size = 0x12000, scoped, tag = 'internal scratch']
  #allocation2 [shape = 'bf16[1024,256]{1,0:T(16,128)(2,1)}', space=vmem, size = 0x80000, scoped, tag = 'scratch operand']
  #allocation3 [shape = 's32[1]{0}', space=sflag, size = 0x4, scoped, tag = 'scratch operand']
  #allocation13 [shape = 's32[]', space=sflag, size = 0x4, offset = 0, fixed_abs, tag = 'sflag constant byte address 0x0 - dummy sync flag']
  %s0 = inlined_call_operand.hbm [shape: f32[8,8], index: 0, kind: input, shape index: {}]
  %s1 = inlined_call_operand.hbm [shape: f32[8,128], index: 1, kind: input, shape index: {}]
  %s2 = inlined_call_operand.hbm [shape: f32[128,128], index: 2, kind: input, shape index: {}]
  %s3 = inlined_call_operand.hbm [shape: f32[1,128], index: 3, kind: input, shape index: {}]
  %s4 = inlined_call_operand.vmem [shape: f32[1,1024], index: 4, kind: input, shape index: {}]
  %s5 = inlined_call_operand.vmem [shape: f32[1,1024], index: 5, kind: input, shape index: {}]
  %s6 = inlined_call_operand.hbm [shape: bf16[1024,256], index: 6, kind: input, shape index: {}]
  %s7 = inlined_call_operand.vmem [shape: f32[1,256], index: 7, kind: input, shape index: {}]
  %s8 = inlined_call_operand.vmem [shape: f32[8,128], index: 8, kind: input, shape index: {}]
  %s9 = inlined_call_operand.hbm [shape: f32[8,256], index: 9, kind: output, shape index: {}]
  %s10 = sld [smem:[#allocation0]]
  $region58: #{tpu_custom_call.1} parent=0
    _
  %s12 = ssub.s32 1, %s10
  %s13 = scalar_select 0, %s12, %s10
  $region1: #{tpu_custom_call.1} parent=0
    #allocation4 [shape = 'u8[4096]{0}', space=vmem, size = 0x1000, scoped, tag = 'input window, operand 0, single buffered']
    #allocation5 [shape = 's32[1]{0}', space=sflag, size = 0x4, scoped, tag = 'scoped memory for tpu_custom_call.1']
    #allocation6 [shape = 's32[1]{0}', space=sflag, size = 0x4, scoped, tag = 'scoped memory for tpu_custom_call.1']
    #allocation7 [shape = 'u8[4096]{0}', space=vmem, size = 0x1000, scoped, tag = 'input window, operand 1, single buffered']
    #allocation8 [shape = 's32[1]{0}', space=sflag, size = 0x4, scoped, tag = 'scoped memory for tpu_custom_call.1']
    #allocation9 [shape = 'u8[65536]{0}', space=vmem, size = 0x10000, scoped, tag = 'input window, operand 2, single buffered']
    #allocation10 [shape = 'u8[512]{0}', space=vmem, size = 0x400, scoped, tag = 'input window, operand 3, single buffered']
    #allocation11 [shape = 's32[1]{0}', space=sflag, size = 0x4, scoped, tag = 'scoped memory for tpu_custom_call.1']
    #allocation12 [shape = 'u8[8192]{0}', space=vmem, size = 0x2000, scoped, tag = 'output window, operand 0, single buffered']
    #allocation14 [shape = 'u32[9]{0}', space=smem, size = 0x24, scoped, tag = 'DMA stride descriptor']
    %14 = vsyncpa [#allocation5], 0
    %15 = vsyncpa [#allocation8], 0
    %16 = vsyncpa [#allocation11], 0
    %17 = vsyncpa [#allocation6], 0
    // Predicated region
    $region2: #{tpu_custom_call.1} parent=1 // pred_check
      _
    $region3: #{tpu_custom_call.1} parent=1 // pred_check_branch
      %19 = sbr.rel (0) target = $region5
    $region4: #{tpu_custom_call.1} parent=1 // pred_region
      %s21 = ssub.s32 128, 128
      %22 = vsyncadd [#allocation5], %s21
      %s24 = sshll.u32 [#allocation4], 4
      %s25 = int_to_ptr.vmem [resolvable:$true] %s24
      %27 = dma.hbm_to_vmem [thread:$0]  %s0, 128, %s25, [#allocation5]
    $region5: #{tpu_custom_call.1} parent=1 // pred_fallthru
      _
    // Predicated region
    $region6: #{tpu_custom_call.1} parent=1 // pred_check
      _
    $region7: #{tpu_custom_call.1} parent=1 // pred_check_branch
      %29 = sbr.rel (0) target = $region9
    $region8: #{tpu_custom_call.1} parent=1 // pred_region
      %s31 = ssub.s32 128, 128
      %32 = vsyncadd [#allocation8], %s31
      %s34 = sshll.u32 [#allocation7], 4
      %s35 = int_to_ptr.vmem [resolvable:$true] %s34
      %37 = dma.hbm_to_vmem [thread:$0]  %s1, 128, %s35, [#allocation8]
    $region9: #{tpu_custom_call.1} parent=1 // pred_fallthru
      _
    // Predicated region
    $region10: #{tpu_custom_call.1} parent=1 // pred_check
      _
    $region11: #{tpu_custom_call.1} parent=1 // pred_check_branch
      %39 = sbr.rel (0) target = $region13
    $region12: #{tpu_custom_call.1} parent=1 // pred_region
      %s41 = ssub.s32 2048, 2048
      %42 = vsyncadd [#allocation8], %s41
      %s43 = sshll.u32 [#allocation9], 4
      %s44 = int_to_ptr.vmem [resolvable:$true] %s43
      %49 = dma.hbm_to_vmem [thread:$0]  %s2, 2048, %s44, [#allocation8], 128, 128, 8
    $region13: #{tpu_custom_call.1} parent=1 // pred_fallthru
      _
    // Predicated region
    $region14: #{tpu_custom_call.1} parent=1 // pred_check
      _
    $region15: #{tpu_custom_call.1} parent=1 // pred_check_branch
      %51 = sbr.rel (0) target = $region17
    $region16: #{tpu_custom_call.1} parent=1 // pred_region
      %s53 = ssub.s32 16, 16
      %54 = vsyncadd [#allocation11], %s53
      %s56 = sshll.u32 [#allocation10], 4
      %s57 = int_to_ptr.vmem [resolvable:$true] %s56
      %59 = dma.hbm_to_vmem [thread:$0]  %s3, 16, %s57, [#allocation11]
    $region17: #{tpu_custom_call.1} parent=1 // pred_fallthru
      _
    // Predicated region
    $region18: #{tpu_custom_call.1} parent=1 // pred_check
      _
    $region19: #{tpu_custom_call.1} parent=1 // pred_check_branch
      %61 = sbr.rel (0) target = $region21
    $region20: #{tpu_custom_call.1} parent=1 // pred_region
      _
    $region21: #{tpu_custom_call.1} parent=1 // pred_fallthru
      _
    // Predicated region
    $region22: #{tpu_custom_call.1} parent=1 // pred_check
      _
    $region23: #{tpu_custom_call.1} parent=1 // pred_check_branch
      %63 = sbr.rel (0) target = $region25
    $region24: #{tpu_custom_call.1} parent=1 // pred_region
      _
    $region25: #{tpu_custom_call.1} parent=1 // pred_fallthru
      _
    // Predicated region
    $region26: #{tpu_custom_call.1} parent=1 // pred_check
      _
    $region27: #{tpu_custom_call.1} parent=1 // pred_check_branch
      %65 = sbr.rel (0) target = $region29
    $region28: #{tpu_custom_call.1} parent=1 // pred_region
      _
    $region29: #{tpu_custom_call.1} parent=1 // pred_fallthru
      _
    // Predicated region
    $region30: #{tpu_custom_call.1} parent=1 // pred_check
      _
    $region31: #{tpu_custom_call.1} parent=1 // pred_check_branch
      %67 = sbr.rel (0) target = $region33
    $region32: #{tpu_custom_call.1} parent=1 // pred_region
      _
    $region33: #{tpu_custom_call.1} parent=1 // pred_fallthru
      _
    // Predicated region
    $region34: #{tpu_custom_call.1} parent=1 // pred_check
      _
    $region35: #{tpu_custom_call.1} parent=1 // pred_check_branch
      %69 = sbr.rel (0) target = $region37
    $region36: #{tpu_custom_call.1} parent=1 // pred_region
      %70 = dma.done [#allocation5], 128
    $region37: #{tpu_custom_call.1} parent=1 // pred_fallthru
      _
    // Predicated region
    $region38: #{tpu_custom_call.1} parent=1 // pred_check
      _
    $region39: #{tpu_custom_call.1} parent=1 // pred_check_branch
      %72 = sbr.rel (0) target = $region41
    $region40: #{tpu_custom_call.1} parent=1 // pred_region
      %73 = dma.done [#allocation8], 128
    $region41: #{tpu_custom_call.1} parent=1 // pred_fallthru
      _
    // Predicated region
    $region42: #{tpu_custom_call.1} parent=1 // pred_check
      _
    $region43: #{tpu_custom_call.1} parent=1 // pred_check_branch
      %75 = sbr.rel (0) target = $region45
    $region44: #{tpu_custom_call.1} parent=1 // pred_region
      %76 = dma.done [#allocation8], 2048
    $region45: #{tpu_custom_call.1} parent=1 // pred_fallthru
      _
    // Predicated region
    $region46: #{tpu_custom_call.1} parent=1 // pred_check
      _
    $region47: #{tpu_custom_call.1} parent=1 // pred_check_branch
      %78 = sbr.rel (0) target = $region49
    $region48: #{tpu_custom_call.1} parent=1 // pred_region
      %79 = dma.done [#allocation11], 16
    $region49: #{tpu_custom_call.1} parent=1 // pred_fallthru
      _
    %s81 = sshll.u32 1, 14
    %s82 = sxor.u32 4294967295, %s81
    %s84 = sld [smem:[#allocation0]]
    %s85 = sadd.s32 2, %s84
    %s87 = sshll.u32 7, 26
    %s88 = sxor.u32 4294967295, %s87
    %s89 = sand.u32 0, %s88
    %s90 = sshll.u32 %s85, 26
    %s91 = sor.u32 %s89, %s90
    %s92 = sshll.u32 [#allocation2], 4
    %s93 = int_to_ptr.vmem [resolvable:$true] %s92
    %96 = sst [smem:[#allocation14]] 256
    %s97 = scalar_lea.smem [#allocation14], 1
    %98 = sst [smem:[%s97]] 256
    %s99 = scalar_lea.smem [#allocation14], 2
    %100 = sst [smem:[%s99]] 2
    %s101 = scalar_lea.smem [#allocation14], 3
    %102 = sst [smem:[%s101]] 64
    %s103 = scalar_lea.smem [#allocation14], 4
    %104 = sst [smem:[%s103]] 128
    %s105 = scalar_lea.smem [#allocation14], 5
    %106 = sst [smem:[%s105]] 2
    %s107 = scalar_lea.smem [#allocation14], 6
    %108 = sst [smem:[%s107]] 128
    %s109 = scalar_lea.smem [#allocation14], 7
    %110 = sst [smem:[%s109]] 64
    %s111 = scalar_lea.smem [#allocation14], 8
    %112 = sst [smem:[%s111]] 4
    %114 = dma.general %s6, 16384, %s93, [#allocation3], [#allocation13], [#allocation14], %s91, 0
    %v115 = vld [vmem:[#allocation4] sm:$0xff]
    %v116 = vld [vmem:[%s8] sm:$0x1]
    %v117 = vld [vmem:[%s8 + $0x1] sm:$0x1]
    %v118 = vld [vmem:[%s8 + $0x2] sm:$0x1]
    %v119 = vld [vmem:[%s8 + $0x3] sm:$0x1]
    %v120 = vld [vmem:[%s8 + $0x4] sm:$0x1]
    %v121 = vld [vmem:[%s8 + $0x5] sm:$0x1]
    %v122 = vld [vmem:[%s8 + $0x6] sm:$0x1]
    %v123 = vld [vmem:[#allocation7] sm:$0x1]
    %125 = vset.pattern.permute.xlu0 0
    %126 = vperm.xlu0 %125, %v115
    %v127 = vpop.permute.xlu0 %126
    %v129 = vlaneseq
    %v130 = vshrl.u32 %v129, 7
    %v131 = vsub.s32 0, %v130
    %v132 = vrot.slane %v123, %v131
    %v133 = vmul.f32 %v127, %v132
    %v134 = vlaneseq
    %v135 = vshrl.u32 %v134, 7
    %v136 = vsub.s32 0, %v135
    %v137 = vrot.slane %v121, %v136
    %v138 = vadd.f32 %v133, %v137
    %v139 = vld [vmem:[#allocation7 + $0x1] sm:$0x1]
    %140 = vset.pattern.permute.xlu0 1
    %141 = vperm.xlu0 %140, %v115
    %v142 = vpop.permute.xlu0 %141
    %v144 = vlaneseq
    %v145 = vshrl.u32 %v144, 7
    %v146 = vsub.s32 0, %v145
    %v147 = vrot.slane %v139, %v146
    %v148 = vmul.f32 %v142, %v147
    %v149 = vadd.f32 %v138, %v148
    %v150 = vld [vmem:[#allocation7 + $0x2] sm:$0x1]
    %151 = vset.pattern.permute.xlu0 2
    %152 = vperm.xlu0 %151, %v115
    %v153 = vpop.permute.xlu0 %152
    %v155 = vlaneseq
    %v156 = vshrl.u32 %v155, 7
    %v157 = vsub.s32 0, %v156
    %v158 = vrot.slane %v150, %v157
    %v159 = vmul.f32 %v153, %v158
    %v160 = vadd.f32 %v149, %v159
    %v161 = vld [vmem:[#allocation7 + $0x3] sm:$0x1]
    %162 = vset.pattern.permute.xlu0 3
    %163 = vperm.xlu0 %162, %v115
    %v164 = vpop.permute.xlu0 %163
    %v166 = vlaneseq
    %v167 = vshrl.u32 %v166, 7
    %v168 = vsub.s32 0, %v167
    %v169 = vrot.slane %v161, %v168
    %v170 = vmul.f32 %v164, %v169
    %v171 = vadd.f32 %v160, %v170
    %v172 = vld [vmem:[#allocation7 + $0x4] sm:$0x1]
    %173 = vset.pattern.permute.xlu0 4
    %174 = vperm.xlu0 %173, %v115
    %v175 = vpop.permute.xlu0 %174
    %v177 = vlaneseq
    %v178 = vshrl.u32 %v177, 7
    %v179 = vsub.s32 0, %v178
    %v180 = vrot.slane %v172, %v179
    %v181 = vmul.f32 %v175, %v180
    %v182 = vadd.f32 %v171, %v181
    %v183 = vld [vmem:[#allocation7 + $0x5] sm:$0x1]
    %184 = vset.pattern.permute.xlu0 5
    %185 = vperm.xlu0 %184, %v115
    %v186 = vpop.permute.xlu0 %185
    %v188 = vlaneseq
    %v189 = vshrl.u32 %v188, 7
    %v190 = vsub.s32 0, %v189
    %v191 = vrot.slane %v183, %v190
    %v192 = vmul.f32 %v186, %v191
    %v193 = vadd.f32 %v182, %v192
    %v194 = vld [vmem:[#allocation7 + $0x6] sm:$0x1]
    %195 = vset.pattern.permute.xlu0 6
    %196 = vperm.xlu0 %195, %v115
    %v197 = vpop.permute.xlu0 %196
    %v199 = vlaneseq
    %v200 = vshrl.u32 %v199, 7
    %v201 = vsub.s32 0, %v200
    %v202 = vrot.slane %v194, %v201
    %v203 = vmul.f32 %v197, %v202
    %v204 = vadd.f32 %v193, %v203
    %v205 = vld [vmem:[#allocation7 + $0x7] sm:$0x1]
    %206 = vset.pattern.permute.xlu0 7
    %207 = vperm.xlu0 %206, %v115
    %v208 = vpop.permute.xlu0 %207
    %v210 = vlaneseq
    %v211 = vshrl.u32 %v210, 7
    %v212 = vsub.s32 0, %v211
    %v213 = vrot.slane %v205, %v212
    %v214 = vmul.f32 %v208, %v213
    %v215 = vadd.f32 %v204, %v214
    %v216 = vrot.slane %v215, 4
    %v217 = vadd.f32 %v215, %v216
    %v218 = vrot.slane %v217, 2
    %v219 = vadd.f32 %v217, %v218
    %v220 = vrot.slane %v219, 1
    %v221 = vadd.f32 %v219, %v220
    %v222 = vrcp.pop 8.0
    %v223 = vmul.f32 %v221, %v222
    %v224 = vsub.f32 %v215, %v223
    %v225 = vmul.f32 %v224, %v224
    %v226 = vrot.slane %v225, 4
    %v227 = vadd.f32 %v225, %v226
    %v228 = vrot.slane %v227, 2
    %v229 = vadd.f32 %v227, %v228
    %v230 = vrot.slane %v229, 1
    %v231 = vadd.f32 %v229, %v230
    %v232 = vmul.f32 %v231, %v222
    %v233 = vadd.f32 %v232, 1e-05
    %v234 = vrsqrt.pop %v233
    %v235 = vmul.f32 %v224, %v234
    %v236 = vlaneseq
    %v237 = vshrl.u32 %v236, 7
    %v238 = vsub.s32 0, %v237
    %v239 = vrot.slane %v116, %v238
    %v240 = vmul.f32 %v235, %v239
    %v241 = vlaneseq
    %v242 = vshrl.u32 %v241, 7
    %v243 = vsub.s32 0, %v242
    %v244 = vrot.slane %v117, %v243
    %v245 = vadd.f32 %v240, %v244
    %v246 = vmax.f32 %v245, 0.0
    %v247 = vld [vmem:[#allocation9] sm:$0xff]
    %v248 = vld [vmem:[#allocation9 + $0x8] sm:$0xff]
    %v249 = vld [vmem:[#allocation9 + $0x10] sm:$0xff]
    %v250 = vld [vmem:[#allocation9 + $0x18] sm:$0xff]
    %v251 = vld [vmem:[#allocation9 + $0x20] sm:$0xff]
    %v252 = vld [vmem:[#allocation9 + $0x28] sm:$0xff]
    %v253 = vld [vmem:[#allocation9 + $0x30] sm:$0xff]
    %v254 = vld [vmem:[#allocation9 + $0x38] sm:$0xff]
    %v255 = vld [vmem:[#allocation9 + $0x40] sm:$0xff]
    %v256 = vld [vmem:[#allocation9 + $0x48] sm:$0xff]
    %v257 = vld [vmem:[#allocation9 + $0x50] sm:$0xff]
    %v258 = vld [vmem:[#allocation9 + $0x58] sm:$0xff]
    %v259 = vld [vmem:[#allocation9 + $0x60] sm:$0xff]
    %v260 = vld [vmem:[#allocation9 + $0x68] sm:$0xff]
    %v261 = vld [vmem:[#allocation9 + $0x70] sm:$0xff]
    %v262 = vld [vmem:[#allocation9 + $0x78] sm:$0xff]
    %v263 = vlaneseq
    %v264 = vshrl.u32 %v263, 7
    %v265 = vsub.s32 0, %v264
    %v266 = vrot.slane %v122, %v265
    %267 = vmatprep.subr.mxu0 0.0
    %268 = vmatpush1.msra.mxu0 %v247
    %269 = vmatprep.subr.mxu0 0.0
    %270 = vmatpush1.msra.mxu0 %v248
    %271 = vmatprep.subr.mxu0 0.0
    %272 = vmatpush1.msra.mxu0 %v249
    %273 = vmatprep.subr.mxu0 0.0
    %274 = vmatpush1.msra.mxu0 %v250
    %275 = vmatprep.subr.mxu0 0.0
    %276 = vmatpush1.msra.mxu0 %v251
    %277 = vmatprep.subr.mxu0 0.0
    %278 = vmatpush1.msra.mxu0 %v252
    %279 = vmatprep.subr.mxu0 0.0
    %280 = vmatpush1.msra.mxu0 %v253
    %281 = vmatprep.subr.mxu0 0.0
    %282 = vmatpush1.msra.mxu0 %v254
    %283 = vmatprep.subr.mxu0 0.0
    %284 = vmatpush1.msra.mxu0 %v255
    %285 = vmatprep.subr.mxu0 0.0
    %286 = vmatpush1.msra.mxu0 %v256
    %287 = vmatprep.subr.mxu0 0.0
    %288 = vmatpush1.msra.mxu0 %v257
    %289 = vmatprep.subr.mxu0 0.0
    %290 = vmatpush1.msra.mxu0 %v258
    %291 = vmatprep.subr.mxu0 0.0
    %292 = vmatpush1.msra.mxu0 %v259
    %293 = vmatprep.subr.mxu0 0.0
    %294 = vmatpush1.msra.mxu0 %v260
    %295 = vmatprep.subr.mxu0 0.0
    %296 = vmatpush1.msra.mxu0 %v261
    %297 = vmatprep.subr.mxu0 0.0
    %298 = vmatpush1.msra.mxu0 %v262
    %299 = vmatprep.subr.mxu0 0.0
    %300 = vmatpush1.msra.mxu0 0.0
    %301 = vmatprep.subr.mxu0 0.0
    %302 = vmatpush1.msra.mxu0 0.0
    %303 = vmatprep.subr.mxu0 0.0
    %304 = vmatpush1.msra.mxu0 0.0
    %305 = vmatprep.subr.mxu0 0.0
    %306 = vmatpush1.msra.mxu0 0.0
    %307 = vmatprep.subr.mxu0 0.0
    %308 = vmatpush1.msra.mxu0 0.0
    %309 = vmatprep.subr.mxu0 0.0
    %310 = vmatpush1.msra.mxu0 0.0
    %311 = vmatprep.subr.mxu0 0.0
    %312 = vmatpush1.msra.mxu0 0.0
    %313 = vmatprep.subr.mxu0 0.0
    %314 = vmatpush1.msra.mxu0 0.0
    %315 = vmatprep.subr.mxu0 0.0
    %316 = vmatpush1.msra.mxu0 0.0
    %317 = vmatprep.subr.mxu0 0.0
    %318 = vmatpush1.msra.mxu0 0.0
    %319 = vmatprep.subr.mxu0 0.0
    %320 = vmatpush1.msra.mxu0 0.0
    %321 = vmatprep.subr.mxu0 0.0
    %322 = vmatpush1.msra.mxu0 0.0
    %323 = vmatprep.subr.mxu0 0.0
    %324 = vmatpush1.msra.mxu0 0.0
    %325 = vmatprep.subr.mxu0 0.0
    %326 = vmatpush1.msra.mxu0 0.0
    %327 = vmatprep.subr.mxu0 0.0
    %328 = vmatpush1.msra.mxu0 0.0
    %329 = vmatprep.subr.mxu0 0.0
    %330 = vmatpush1.msra.mxu0 0.0
    %331 = vmatprep.mubr.f32.mxu0 0.0
    %332 = vmatmul.mubr.f32.gmra.mrb[0].mxu0 %v246
    %v333 = vpop.f32.mrb[0].mxu0
    %v334 = vadd.f32 %v266, %v333
    %v335 = vpop.f32.mrb[0].mxu0
    %336 = vdwg.mxu0
    %v337 = vrot.slane %v334, 4
    %v338 = vadd.f32 %v334, %v337
    %v339 = vrot.slane %v338, 2
    %v340 = vadd.f32 %v338, %v339
    %v341 = vrot.slane %v340, 1
    %v342 = vadd.f32 %v340, %v341
    %v343 = vmul.f32 %v342, %v222
    %v344 = vsub.f32 %v334, %v343
    %v345 = vmul.f32 %v344, %v344
    %v346 = vrot.slane %v345, 4
    %v347 = vadd.f32 %v345, %v346
    %v348 = vrot.slane %v347, 2
    %v349 = vadd.f32 %v347, %v348
    %v350 = vrot.slane %v349, 1
    %v351 = vadd.f32 %v349, %v350
    %v352 = vmul.f32 %v351, %v222
    %v353 = vadd.f32 %v352, 1e-05
    %v354 = vrsqrt.pop %v353
    %v355 = vmul.f32 %v344, %v354
    %v356 = vlaneseq
    %v357 = vshrl.u32 %v356, 7
    %v358 = vsub.s32 0, %v357
    %v359 = vrot.slane %v118, %v358
    %v360 = vmul.f32 %v355, %v359
    %v361 = vlaneseq
    %v362 = vshrl.u32 %v361, 7
    %v363 = vsub.s32 0, %v362
    %v364 = vrot.slane %v119, %v363
    %v365 = vadd.f32 %v360, %v364
    %v366 = vmax.f32 %v365, 0.0
    %v367 = vld [vmem:[#allocation10] sm:$0x1]
    %v369 = vlaneseq
    %v370 = vshrl.u32 %v369, 7
    %v371 = vsub.s32 0, %v370
    %v372 = vrot.slane %v367, %v371
    %v374 = vmul.f32 %v366, %v372
    %375 = vadd.xlane.f32.xlu0 %v374
    %v376 = vpop.xlane.xlu0 %375
    %v377 = vlaneseq
    %v378 = vshrl.u32 %v377, 7
    %v379 = vsub.s32 0, %v378
    %v380 = vrot.slane %v120, %v379
    %v381 = vadd.f32 %v376, %v380
    %v382 = vmax.f32 %v381, 0.0
    %v383 = vld [vmem:[%s4] sm:$0xff]
    %385 = vset.pattern.permute.xlu0 0
    %386 = vperm.xlu0 %385, %v382
    %v387 = vpop.permute.xlu0 %386
    %v390 = vlaneseq
    %v391 = vshrl.u32 %v390, 7
    %v392 = vsub.s32 0, %v391
    %v393 = vrot.slane %v383, %v392
    %v394 = vlaneseq
    %v395 = vshrl.u32 %v394, 7
    %v396 = vsub.s32 1, %v395
    %v397 = vrot.slane %v383, %v396
    %v398 = vlaneseq
    %v399 = vshrl.u32 %v398, 7
    %v400 = vsub.s32 2, %v399
    %v401 = vrot.slane %v383, %v400
    %v402 = vlaneseq
    %v403 = vshrl.u32 %v402, 7
    %v404 = vsub.s32 3, %v403
    %v405 = vrot.slane %v383, %v404
    %v406 = vlaneseq
    %v407 = vshrl.u32 %v406, 7
    %v408 = vsub.s32 4, %v407
    %v409 = vrot.slane %v383, %v408
    %v410 = vlaneseq
    %v411 = vshrl.u32 %v410, 7
    %v412 = vsub.s32 5, %v411
    %v413 = vrot.slane %v383, %v412
    %v414 = vlaneseq
    %v415 = vshrl.u32 %v414, 7
    %v416 = vsub.s32 6, %v415
    %v417 = vrot.slane %v383, %v416
    %v418 = vlaneseq
    %v419 = vshrl.u32 %v418, 7
    %v420 = vsub.s32 7, %v419
    %v421 = vrot.slane %v383, %v420
    %v430 = vmul.f32 %v387, %v393
    %v431 = vmul.f32 %v387, %v397
    %v432 = vmul.f32 %v387, %v401
    %v433 = vmul.f32 %v387, %v405
    %v434 = vmul.f32 %v387, %v409
    %v435 = vmul.f32 %v387, %v413
    %v436 = vmul.f32 %v387, %v417
    %v437 = vmul.f32 %v387, %v421
    %v438 = vld [vmem:[%s5] sm:$0xff]
    %v440 = vlaneseq
    %v441 = vshrl.u32 %v440, 7
    %v442 = vsub.s32 0, %v441
    %v443 = vrot.slane %v438, %v442
    %v444 = vlaneseq
    %v445 = vshrl.u32 %v444, 7
    %v446 = vsub.s32 1, %v445
    %v447 = vrot.slane %v438, %v446
    %v448 = vlaneseq
    %v449 = vshrl.u32 %v448, 7
    %v450 = vsub.s32 2, %v449
    %v451 = vrot.slane %v438, %v450
    %v452 = vlaneseq
    %v453 = vshrl.u32 %v452, 7
    %v454 = vsub.s32 3, %v453
    %v455 = vrot.slane %v438, %v454
    %v456 = vlaneseq
    %v457 = vshrl.u32 %v456, 7
    %v458 = vsub.s32 4, %v457
    %v459 = vrot.slane %v438, %v458
    %v460 = vlaneseq
    %v461 = vshrl.u32 %v460, 7
    %v462 = vsub.s32 5, %v461
    %v463 = vrot.slane %v438, %v462
    %v464 = vlaneseq
    %v465 = vshrl.u32 %v464, 7
    %v466 = vsub.s32 6, %v465
    %v467 = vrot.slane %v438, %v466
    %v468 = vlaneseq
    %v469 = vshrl.u32 %v468, 7
    %v470 = vsub.s32 7, %v469
    %v471 = vrot.slane %v438, %v470
    %v480 = vadd.f32 %v430, %v443
    %v481 = vadd.f32 %v431, %v447
    %v482 = vadd.f32 %v432, %v451
    %v483 = vadd.f32 %v433, %v455
    %v484 = vadd.f32 %v434, %v459
    %v485 = vadd.f32 %v435, %v463
    %v486 = vadd.f32 %v436, %v467
    %v487 = vadd.f32 %v437, %v471
    %v488 = vmax.f32 %v480, 0.0
    %v489 = vmax.f32 %v481, 0.0
    %v490 = vmax.f32 %v482, 0.0
    %v491 = vmax.f32 %v483, 0.0
    %v492 = vmax.f32 %v484, 0.0
    %v493 = vmax.f32 %v485, 0.0
    %v494 = vmax.f32 %v486, 0.0
    %v495 = vmax.f32 %v487, 0.0
    %s496 = smul.u32 4, 128
    %s497 = smul.u32 %s496, 2
    %s498 = sshll.u32 %s497, 4
    %499 = dma.done [#allocation3], %s498
    %v500 = vpack.c.bf16 %v488, %v488
    %v501 = vpack.c.bf16 %v489, %v489
    %v502 = vpack.c.bf16 %v490, %v490
    %v503 = vpack.c.bf16 %v491, %v491
    %v504 = vpack.c.bf16 %v492, %v492
    %v505 = vpack.c.bf16 %v493, %v493
    %v506 = vpack.c.bf16 %v494, %v494
    %v507 = vpack.c.bf16 %v495, %v495
    %v508 = vld [vmem:[#allocation2] sm:$0xff]
    %v509 = vld [vmem:[#allocation2 + $0x8] sm:$0xff]
    %v510 = vld [vmem:[#allocation2 + $0x10] sm:$0xff]
    %v511 = vld [vmem:[#allocation2 + $0x18] sm:$0xff]
    %v512 = vld [vmem:[#allocation2 + $0x20] sm:$0xff]
    %v513 = vld [vmem:[#allocation2 + $0x28] sm:$0xff]
    %v514 = vld [vmem:[#allocation2 + $0x30] sm:$0xff]
    %v515 = vld [vmem:[#allocation2 + $0x38] sm:$0xff]
    %v516 = vld [vmem:[#allocation2 + $0x40] sm:$0xff]
    %v517 = vld [vmem:[#allocation2 + $0x48] sm:$0xff]
    %v518 = vld [vmem:[#allocation2 + $0x50] sm:$0xff]
    %v519 = vld [vmem:[#allocation2 + $0x58] sm:$0xff]
    %v520 = vld [vmem:[#allocation2 + $0x60] sm:$0xff]
    %v521 = vld [vmem:[#allocation2 + $0x68] sm:$0xff]
    %v522 = vld [vmem:[#allocation2 + $0x70] sm:$0xff]
    %v523 = vld [vmem:[#allocation2 + $0x78] sm:$0xff]
    %v524 = vld [vmem:[#allocation2 + $0x80] sm:$0xff]
    %v525 = vld [vmem:[#allocation2 + $0x88] sm:$0xff]
    %v526 = vld [vmem:[#allocation2 + $0x90] sm:$0xff]
    %v527 = vld [vmem:[#allocation2 + $0x98] sm:$0xff]
    %v528 = vld [vmem:[#allocation2 + $0xa0] sm:$0xff]
    %v529 = vld [vmem:[#allocation2 + $0xa8] sm:$0xff]
    %v530 = vld [vmem:[#allocation2 + $0xb0] sm:$0xff]
    %v531 = vld [vmem:[#allocation2 + $0xb8] sm:$0xff]
    %v532 = vld [vmem:[#allocation2 + $0xc0] sm:$0xff]
    %v533 = vld [vmem:[#allocation2 + $0xc8] sm:$0xff]
    %v534 = vld [vmem:[#allocation2 + $0xd0] sm:$0xff]
    %v535 = vld [vmem:[#allocation2 + $0xd8] sm:$0xff]
    %v536 = vld [vmem:[#allocation2 + $0xe0] sm:$0xff]
    %v537 = vld [vmem:[#allocation2 + $0xe8] sm:$0xff]
    %v538 = vld [vmem:[#allocation2 + $0xf0] sm:$0xff]
    %v539 = vld [vmem:[#allocation2 + $0xf8] sm:$0xff]
    %v540 = vld [vmem:[#allocation2 + $0x100] sm:$0xff]
    %v541 = vld [vmem:[#allocation2 + $0x108] sm:$0xff]
    %v542 = vld [vmem:[#allocation2 + $0x110] sm:$0xff]
    %v543 = vld [vmem:[#allocation2 + $0x118] sm:$0xff]
    %v544 = vld [vmem:[#allocation2 + $0x120] sm:$0xff]
    %v545 = vld [vmem:[#allocation2 + $0x128] sm:$0xff]
    %v546 = vld [vmem:[#allocation2 + $0x130] sm:$0xff]
    %v547 = vld [vmem:[#allocation2 + $0x138] sm:$0xff]
    %v548 = vld [vmem:[#allocation2 + $0x140] sm:$0xff]
    %v549 = vld [vmem:[#allocation2 + $0x148] sm:$0xff]
    %v550 = vld [vmem:[#allocation2 + $0x150] sm:$0xff]
    %v551 = vld [vmem:[#allocation2 + $0x158] sm:$0xff]
    %v552 = vld [vmem:[#allocation2 + $0x160] sm:$0xff]
    %v553 = vld [vmem:[#allocation2 + $0x168] sm:$0xff]
    %v554 = vld [vmem:[#allocation2 + $0x170] sm:$0xff]
    %v555 = vld [vmem:[#allocation2 + $0x178] sm:$0xff]
    %v556 = vld [vmem:[#allocation2 + $0x180] sm:$0xff]
    %v557 = vld [vmem:[#allocation2 + $0x188] sm:$0xff]
    %v558 = vld [vmem:[#allocation2 + $0x190] sm:$0xff]
    %v559 = vld [vmem:[#allocation2 + $0x198] sm:$0xff]
    %v560 = vld [vmem:[#allocation2 + $0x1a0] sm:$0xff]
    %v561 = vld [vmem:[#allocation2 + $0x1a8] sm:$0xff]
    %v562 = vld [vmem:[#allocation2 + $0x1b0] sm:$0xff]
    %v563 = vld [vmem:[#allocation2 + $0x1b8] sm:$0xff]
    %v564 = vld [vmem:[#allocation2 + $0x1c0] sm:$0xff]
    %v565 = vld [vmem:[#allocation2 + $0x1c8] sm:$0xff]
    %v566 = vld [vmem:[#allocation2 + $0x1d0] sm:$0xff]
    %v567 = vld [vmem:[#allocation2 + $0x1d8] sm:$0xff]
    %v568 = vld [vmem:[#allocation2 + $0x1e0] sm:$0xff]
    %v569 = vld [vmem:[#allocation2 + $0x1e8] sm:$0xff]
    %v570 = vld [vmem:[#allocation2 + $0x1f0] sm:$0xff]
    %v571 = vld [vmem:[#allocation2 + $0x1f8] sm:$0xff]
    %v572 = vld [vmem:[#allocation2 + $0x200] sm:$0xff]
    %v573 = vld [vmem:[#allocation2 + $0x208] sm:$0xff]
    %v574 = vld [vmem:[#allocation2 + $0x210] sm:$0xff]
    %v575 = vld [vmem:[#allocation2 + $0x218] sm:$0xff]
    %v576 = vld [vmem:[#allocation2 + $0x220] sm:$0xff]
    %v577 = vld [vmem:[#allocation2 + $0x228] sm:$0xff]
    %v578 = vld [vmem:[#allocation2 + $0x230] sm:$0xff]
    %v579 = vld [vmem:[#allocation2 + $0x238] sm:$0xff]
    %v580 = vld [vmem:[#allocation2 + $0x240] sm:$0xff]
    %v581 = vld [vmem:[#allocation2 + $0x248] sm:$0xff]
    %v582 = vld [vmem:[#allocation2 + $0x250] sm:$0xff]
    %v583 = vld [vmem:[#allocation2 + $0x258] sm:$0xff]
    %v584 = vld [vmem:[#allocation2 + $0x260] sm:$0xff]
    %v585 = vld [vmem:[#allocation2 + $0x268] sm:$0xff]
    %v586 = vld [vmem:[#allocation2 + $0x270] sm:$0xff]
    %v587 = vld [vmem:[#allocation2 + $0x278] sm:$0xff]
    %v588 = vld [vmem:[#allocation2 + $0x280] sm:$0xff]
    %v589 = vld [vmem:[#allocation2 + $0x288] sm:$0xff]
    %v590 = vld [vmem:[#allocation2 + $0x290] sm:$0xff]
    %v591 = vld [vmem:[#allocation2 + $0x298] sm:$0xff]
    %v592 = vld [vmem:[#allocation2 + $0x2a0] sm:$0xff]
    %v593 = vld [vmem:[#allocation2 + $0x2a8] sm:$0xff]
    %v594 = vld [vmem:[#allocation2 + $0x2b0] sm:$0xff]
    %v595 = vld [vmem:[#allocation2 + $0x2b8] sm:$0xff]
    %v596 = vld [vmem:[#allocation2 + $0x2c0] sm:$0xff]
    %v597 = vld [vmem:[#allocation2 + $0x2c8] sm:$0xff]
    %v598 = vld [vmem:[#allocation2 + $0x2d0] sm:$0xff]
    %v599 = vld [vmem:[#allocation2 + $0x2d8] sm:$0xff]
    %v600 = vld [vmem:[#allocation2 + $0x2e0] sm:$0xff]
    %v601 = vld [vmem:[#allocation2 + $0x2e8] sm:$0xff]
    %v602 = vld [vmem:[#allocation2 + $0x2f0] sm:$0xff]
    %v603 = vld [vmem:[#allocation2 + $0x2f8] sm:$0xff]
    %v604 = vld [vmem:[#allocation2 + $0x300] sm:$0xff]
    %v605 = vld [vmem:[#allocation2 + $0x308] sm:$0xff]
    %v606 = vld [vmem:[#allocation2 + $0x310] sm:$0xff]
    %v607 = vld [vmem:[#allocation2 + $0x318] sm:$0xff]
    %v608 = vld [vmem:[#allocation2 + $0x320] sm:$0xff]
    %v609 = vld [vmem:[#allocation2 + $0x328] sm:$0xff]
    %v610 = vld [vmem:[#allocation2 + $0x330] sm:$0xff]
    %v611 = vld [vmem:[#allocation2 + $0x338] sm:$0xff]
    %v612 = vld [vmem:[#allocation2 + $0x340] sm:$0xff]
    %v613 = vld [vmem:[#allocation2 + $0x348] sm:$0xff]
    %v614 = vld [vmem:[#allocation2 + $0x350] sm:$0xff]
    %v615 = vld [vmem:[#allocation2 + $0x358] sm:$0xff]
    %v616 = vld [vmem:[#allocation2 + $0x360] sm:$0xff]
    %v617 = vld [vmem:[#allocation2 + $0x368] sm:$0xff]
    %v618 = vld [vmem:[#allocation2 + $0x370] sm:$0xff]
    %v619 = vld [vmem:[#allocation2 + $0x378] sm:$0xff]
    %v620 = vld [vmem:[#allocation2 + $0x380] sm:$0xff]
    %v621 = vld [vmem:[#allocation2 + $0x388] sm:$0xff]
    %v622 = vld [vmem:[#allocation2 + $0x390] sm:$0xff]
    %v623 = vld [vmem:[#allocation2 + $0x398] sm:$0xff]
    %v624 = vld [vmem:[#allocation2 + $0x3a0] sm:$0xff]
    %v625 = vld [vmem:[#allocation2 + $0x3a8] sm:$0xff]
    %v626 = vld [vmem:[#allocation2 + $0x3b0] sm:$0xff]
    %v627 = vld [vmem:[#allocation2 + $0x3b8] sm:$0xff]
    %v628 = vld [vmem:[#allocation2 + $0x3c0] sm:$0xff]
    %v629 = vld [vmem:[#allocation2 + $0x3c8] sm:$0xff]
    %v630 = vld [vmem:[#allocation2 + $0x3d0] sm:$0xff]
    %v631 = vld [vmem:[#allocation2 + $0x3d8] sm:$0xff]
    %v632 = vld [vmem:[#allocation2 + $0x3e0] sm:$0xff]
    %v633 = vld [vmem:[#allocation2 + $0x3e8] sm:$0xff]
    %v634 = vld [vmem:[#allocation2 + $0x3f0] sm:$0xff]
    %v635 = vld [vmem:[#allocation2 + $0x3f8] sm:$0xff]
    %v636 = vld [vmem:[%s7] sm:$0x3]
    %v638 = vlaneseq
    %v639 = vshrl.u32 %v638, 7
    %v640 = vsub.s32 0, %v639
    %v641 = vrot.slane %v636, %v640
    %v642 = vlaneseq
    %v643 = vshrl.u32 %v642, 7
    %v644 = vsub.s32 1, %v643
    %v645 = vrot.slane %v636, %v644
    %648 = vmatprep.subr.bf16.mxu0 %v509
    %649 = vmatpush1.bf16.msra.mxu0 %v508
    %650 = vmatprep.subr.bf16.mxu0 %v511
    %651 = vmatpush1.bf16.msra.mxu0 %v510
    %652 = vmatprep.subr.bf16.mxu0 %v513
    %653 = vmatpush1.bf16.msra.mxu0 %v512
    %654 = vmatprep.subr.bf16.mxu0 %v515
    %655 = vmatpush1.bf16.msra.mxu0 %v514
    %656 = vmatprep.subr.bf16.mxu0 %v517
    %657 = vmatpush1.bf16.msra.mxu0 %v516
    %658 = vmatprep.subr.bf16.mxu0 %v519
    %659 = vmatpush1.bf16.msra.mxu0 %v518
    %660 = vmatprep.subr.bf16.mxu0 %v521
    %661 = vmatpush1.bf16.msra.mxu0 %v520
    %662 = vmatprep.subr.bf16.mxu0 %v523
    %663 = vmatpush1.bf16.msra.mxu0 %v522
    %664 = vmatprep.subr.bf16.mxu0 %v525
    %665 = vmatpush1.bf16.msra.mxu0 %v524
    %666 = vmatprep.subr.bf16.mxu0 %v527
    %667 = vmatpush1.bf16.msra.mxu0 %v526
    %668 = vmatprep.subr.bf16.mxu0 %v529
    %669 = vmatpush1.bf16.msra.mxu0 %v528
    %670 = vmatprep.subr.bf16.mxu0 %v531
    %671 = vmatpush1.bf16.msra.mxu0 %v530
    %672 = vmatprep.subr.bf16.mxu0 %v533
    %673 = vmatpush1.bf16.msra.mxu0 %v532
    %674 = vmatprep.subr.bf16.mxu0 %v535
    %675 = vmatpush1.bf16.msra.mxu0 %v534
    %676 = vmatprep.subr.bf16.mxu0 %v537
    %677 = vmatpush1.bf16.msra.mxu0 %v536
    %678 = vmatprep.subr.bf16.mxu0 %v539
    %679 = vmatpush1.bf16.msra.mxu0 %v538
    %680 = vmatprep.mubr.bf16.mxu0 %v501
    %681 = vmatmul.mubr.bf16.gmra.mrb[0].mxu0 %v500
    %v682 = vpop.f32.mrb[0].mxu0
    %v683 = vadd.f32 %v641, %v682
    %v684 = vpop.f32.mrb[0].mxu0
    %v685 = vadd.f32 %v645, %v684
    %v686 = vpop.f32.mrb[0].mxu0
    %v687 = vpop.f32.mrb[0].mxu0
    %688 = vdwg.mxu0
    %689 = vmatprep.subr.bf16.mxu0 %v541
    %690 = vmatpush1.bf16.msra.mxu0 %v540
    %691 = vmatprep.subr.bf16.mxu0 %v543
    %692 = vmatpush1.bf16.msra.mxu0 %v542
    %693 = vmatprep.subr.bf16.mxu0 %v545
    %694 = vmatpush1.bf16.msra.mxu0 %v544
    %695 = vmatprep.subr.bf16.mxu0 %v547
    %696 = vmatpush1.bf16.msra.mxu0 %v546
    %697 = vmatprep.subr.bf16.mxu0 %v549
    %698 = vmatpush1.bf16.msra.mxu0 %v548
    %699 = vmatprep.subr.bf16.mxu0 %v551
    %700 = vmatpush1.bf16.msra.mxu0 %v550
    %701 = vmatprep.subr.bf16.mxu0 %v553
    %702 = vmatpush1.bf16.msra.mxu0 %v552
    %703 = vmatprep.subr.bf16.mxu0 %v555
    %704 = vmatpush1.bf16.msra.mxu0 %v554
    %705 = vmatprep.subr.bf16.mxu0 %v557
    %706 = vmatpush1.bf16.msra.mxu0 %v556
    %707 = vmatprep.subr.bf16.mxu0 %v559
    %708 = vmatpush1.bf16.msra.mxu0 %v558
    %709 = vmatprep.subr.bf16.mxu0 %v561
    %710 = vmatpush1.bf16.msra.mxu0 %v560
    %711 = vmatprep.subr.bf16.mxu0 %v563
    %712 = vmatpush1.bf16.msra.mxu0 %v562
    %713 = vmatprep.subr.bf16.mxu0 %v565
    %714 = vmatpush1.bf16.msra.mxu0 %v564
    %715 = vmatprep.subr.bf16.mxu0 %v567
    %716 = vmatpush1.bf16.msra.mxu0 %v566
    %717 = vmatprep.subr.bf16.mxu0 %v569
    %718 = vmatpush1.bf16.msra.mxu0 %v568
    %719 = vmatprep.subr.bf16.mxu0 %v571
    %720 = vmatpush1.bf16.msra.mxu0 %v570
    %721 = vmatprep.mubr.bf16.mxu0 %v503
    %722 = vmatmul.mubr.bf16.gmra.mrb[0].mxu0 %v502
    %v723 = vpop.f32.mrb[0].mxu0
    %v724 = vadd.f32 %v683, %v723
    %v725 = vpop.f32.mrb[0].mxu0
    %v726 = vadd.f32 %v685, %v725
    %v727 = vpop.f32.mrb[0].mxu0
    %v728 = vpop.f32.mrb[0].mxu0
    %729 = vdwg.mxu0
    %730 = vmatprep.subr.bf16.mxu0 %v573
    %731 = vmatpush1.bf16.msra.mxu0 %v572
    %732 = vmatprep.subr.bf16.mxu0 %v575
    %733 = vmatpush1.bf16.msra.mxu0 %v574
    %734 = vmatprep.subr.bf16.mxu0 %v577
    %735 = vmatpush1.bf16.msra.mxu0 %v576
    %736 = vmatprep.subr.bf16.mxu0 %v579
    %737 = vmatpush1.bf16.msra.mxu0 %v578
    %738 = vmatprep.subr.bf16.mxu0 %v581
    %739 = vmatpush1.bf16.msra.mxu0 %v580
    %740 = vmatprep.subr.bf16.mxu0 %v583
    %741 = vmatpush1.bf16.msra.mxu0 %v582
    %742 = vmatprep.subr.bf16.mxu0 %v585
    %743 = vmatpush1.bf16.msra.mxu0 %v584
    %744 = vmatprep.subr.bf16.mxu0 %v587
    %745 = vmatpush1.bf16.msra.mxu0 %v586
    %746 = vmatprep.subr.bf16.mxu0 %v589
    %747 = vmatpush1.bf16.msra.mxu0 %v588
    %748 = vmatprep.subr.bf16.mxu0 %v591
    %749 = vmatpush1.bf16.msra.mxu0 %v590
    %750 = vmatprep.subr.bf16.mxu0 %v593
    %751 = vmatpush1.bf16.msra.mxu0 %v592
    %752 = vmatprep.subr.bf16.mxu0 %v595
    %753 = vmatpush1.bf16.msra.mxu0 %v594
    %754 = vmatprep.subr.bf16.mxu0 %v597
    %755 = vmatpush1.bf16.msra.mxu0 %v596
    %756 = vmatprep.subr.bf16.mxu0 %v599
    %757 = vmatpush1.bf16.msra.mxu0 %v598
    %758 = vmatprep.subr.bf16.mxu0 %v601
    %759 = vmatpush1.bf16.msra.mxu0 %v600
    %760 = vmatprep.subr.bf16.mxu0 %v603
    %761 = vmatpush1.bf16.msra.mxu0 %v602
    %762 = vmatprep.mubr.bf16.mxu0 %v505
    %763 = vmatmul.mubr.bf16.gmra.mrb[0].mxu0 %v504
    %v764 = vpop.f32.mrb[0].mxu0
    %v765 = vadd.f32 %v724, %v764
    %v766 = vpop.f32.mrb[0].mxu0
    %v767 = vadd.f32 %v726, %v766
    %v768 = vpop.f32.mrb[0].mxu0
    %v769 = vpop.f32.mrb[0].mxu0
    %770 = vdwg.mxu0
    %771 = vmatprep.subr.bf16.mxu0 %v605
    %772 = vmatpush1.bf16.msra.mxu0 %v604
    %773 = vmatprep.subr.bf16.mxu0 %v607
    %774 = vmatpush1.bf16.msra.mxu0 %v606
    %775 = vmatprep.subr.bf16.mxu0 %v609
    %776 = vmatpush1.bf16.msra.mxu0 %v608
    %777 = vmatprep.subr.bf16.mxu0 %v611
    %778 = vmatpush1.bf16.msra.mxu0 %v610
    %779 = vmatprep.subr.bf16.mxu0 %v613
    %780 = vmatpush1.bf16.msra.mxu0 %v612
    %781 = vmatprep.subr.bf16.mxu0 %v615
    %782 = vmatpush1.bf16.msra.mxu0 %v614
    %783 = vmatprep.subr.bf16.mxu0 %v617
    %784 = vmatpush1.bf16.msra.mxu0 %v616
    %785 = vmatprep.subr.bf16.mxu0 %v619
    %786 = vmatpush1.bf16.msra.mxu0 %v618
    %787 = vmatprep.subr.bf16.mxu0 %v621
    %788 = vmatpush1.bf16.msra.mxu0 %v620
    %789 = vmatprep.subr.bf16.mxu0 %v623
    %790 = vmatpush1.bf16.msra.mxu0 %v622
    %791 = vmatprep.subr.bf16.mxu0 %v625
    %792 = vmatpush1.bf16.msra.mxu0 %v624
    %793 = vmatprep.subr.bf16.mxu0 %v627
    %794 = vmatpush1.bf16.msra.mxu0 %v626
    %795 = vmatprep.subr.bf16.mxu0 %v629
    %796 = vmatpush1.bf16.msra.mxu0 %v628
    %797 = vmatprep.subr.bf16.mxu0 %v631
    %798 = vmatpush1.bf16.msra.mxu0 %v630
    %799 = vmatprep.subr.bf16.mxu0 %v633
    %800 = vmatpush1.bf16.msra.mxu0 %v632
    %801 = vmatprep.subr.bf16.mxu0 %v635
    %802 = vmatpush1.bf16.msra.mxu0 %v634
    %803 = vmatprep.mubr.bf16.mxu0 %v507
    %804 = vmatmul.mubr.bf16.gmra.mrb[0].mxu0 %v506
    %v805 = vpop.f32.mrb[0].mxu0
    %v806 = vadd.f32 %v765, %v805
    %v807 = vpop.f32.mrb[0].mxu0
    %v808 = vadd.f32 %v767, %v807
    %v809 = vpop.f32.mrb[0].mxu0
    %v810 = vpop.f32.mrb[0].mxu0
    %811 = vdwg.mxu0
    %v812 = vxor.u32 %v806, 2147483648
    %v813 = vxor.u32 %v808, 2147483648
    %v814 = vmul.f32 %v812, 1.442695
    %v815 = vpow.pop %v814
    %v816 = vmul.f32 %v813, 1.442695
    %v817 = vpow.pop %v816
    %v818 = vadd.f32 %v815, 1.0
    %v819 = vadd.f32 %v817, 1.0
    %v820 = vrcp.pop %v818
    %v821 = vmul.f32 1.0, %v820
    %v822 = vrcp.pop %v819
    %v823 = vmul.f32 1.0, %v822
    %824 = vst [vmem:[#allocation12] sm:$0xff] %v821
    %825 = vst [vmem:[#allocation12 + $0x8] sm:$0xff] %v823
    // Predicated region
    $region50: #{tpu_custom_call.1} parent=1 // pred_check
      _
    $region51: #{tpu_custom_call.1} parent=1 // pred_check_branch
      %827 = sbr.rel (0) target = $region53
    $region52: #{tpu_custom_call.1} parent=1 // pred_region
      %s829 = ssub.s32 256, 256
      %830 = vsyncadd [#allocation6], %s829
      %s832 = sshll.u32 [#allocation12], 4
      %s833 = int_to_ptr.vmem [resolvable:$true] %s832
      %835 = dma.vmem_to_hbm [thread:$0]  %s833, 256, %s9, [#allocation6]
    $region53: #{tpu_custom_call.1} parent=1 // pred_fallthru
      _
    // Predicated region
    $region54: #{tpu_custom_call.1} parent=1 // pred_check
      _
    $region55: #{tpu_custom_call.1} parent=1 // pred_check_branch
      %837 = sbr.rel (0) target = $region57
    $region56: #{tpu_custom_call.1} parent=1 // pred_region
      %838 = dma.done [#allocation6], 256
    $region57: #{tpu_custom_call.1} parent=1 // pred_fallthru
      _
    %839 = vsyncpa [#allocation5], 1
    %840 = vsyncpa [#allocation8], 1
    %841 = vsyncpa [#allocation11], 1
    %842 = vsyncpa [#allocation6], 1
  %843 = vsyncmov [#allocation3]
  %s844 = vpop.sfrf %843
  %p845 = scmp.eq.s32.totalorder %s844, 0
  %p846 = pneg %p845
  %848 = shalt.err (%p846)

</llo_original>
